<compile_context>
chip_gen: v5e
topology: v5e:2x2
jax: 0.10.0
libtpu: 0.0.40
codegen_flags: <defaults>
</compile_context>

<pallas_src>
import jax
import jax.numpy as jnp
from jax.experimental import pallas as pl
from jax.experimental.pallas import tpu as pltpu


def _round_up(x, m):
    return (x + m - 1) // m * m


def gated_fusion_kernel(zs_ref, zt_ref, w_ref, b_ref, o_ref):
    # zs_ref: (tb, struct_dim)         z_struct tile
    # zt_ref: (tb, text_dim)           z_text tile
    # w_ref : (struct_dim, text_dim)   PyTorch Linear weight, used as-is
    # b_ref : (1, struct_dim)
    #
    # Gate logits = z_text @ W^T + b, expressed as a dot_general contracting
    # z_text dim 1 against W dim 1 (MXU handles the transposed RHS directly;
    # no transposed weight copy needed).
    logits = jax.lax.dot_general(
        zt_ref[...], w_ref[...],
        dimension_numbers=(((1,), (1,)), ((), ())),
        preferred_element_type=jnp.float32,
    ) + b_ref[...].astype(jnp.float32)
    gate = jax.nn.sigmoid(logits)                      # EUP
    zs = zs_ref[...].astype(jnp.float32)
    # z_struct * gate + z_struct == z_struct * (1 + gate)   (one VPU mul + add)
    o_ref[...] = (zs * (gate + 1.0)).astype(o_ref.dtype)


def _pick_batch_tile(B, struct_dim, text_dim, itemsize):
    """Largest batch tile whose double-buffered row traffic stays well inside
    the 32 MiB scoped-VMEM default (safe on v5e/v6e/v7x), capped at 1024 rows,
    while keeping >= 2 grid steps when possible so v7x can use both TCs."""
    row_bytes = (2 * struct_dim + text_dim) * itemsize   # zs in + out + zt in
    budget = 24 * 1024 * 1024                            # headroom under 32 MiB
    tb = budget // (2 * row_bytes)                       # 2x: double buffering
    tb = int(max(8, min(tb, 1024)))
    if B > 8:                                            # prefer >= 2 grid steps
        tb = min(tb, max(8, _round_up(B, 16) // 2))
    tb = _round_up(min(tb, max(B, 8)), 8)                # sublane multiple of 8
    return tb


def gated_fusion(z_struct, z_text, weight, bias, *, tb=None):
    """Pallas TPU GatedFusion.forward.

    z_struct: [B, struct_dim]
    z_text  : [B, text_dim]
    weight  : [struct_dim, text_dim]  (PyTorch nn.Linear layout, used as-is)
    bias    : [struct_dim]
    """
    B, struct_dim = z_struct.shape
    Bt, text_dim = z_text.shape
    assert Bt == B
    assert weight.shape == (struct_dim, text_dim)
    assert bias.shape == (struct_dim,)

    itemsize = jnp.dtype(z_struct.dtype).itemsize
    if tb is None:
        tb = _pick_batch_tile(B, struct_dim, text_dim, itemsize)

    # Tail handling: pad batch to a multiple of the tile, slice output back.
    Bp = _round_up(B, tb)
    if Bp != B:
        pad = Bp - B
        z_struct = jnp.pad(z_struct, ((0, pad), (0, 0)))
        z_text = jnp.pad(z_text, ((0, pad), (0, 0)))

    b2d = bias.reshape(1, struct_dim)   # keep 2-D for TPU layout
    grid = (Bp // tb,)

    # VMEM budget: double-buffered row tiles + (worst case 2x) resident W/bias.
    tile_bytes = 2 * tb * (2 * struct_dim + text_dim) * itemsize
    w_bytes = 2 * (struct_dim * text_dim + struct_dim) * jnp.dtype(weight.dtype).itemsize
    vmem_limit = int(min(48 * 1024 * 1024,                      # < v7x physical
                         max(32 * 1024 * 1024, 2 * (tile_bytes + w_bytes))))

    out = pl.pallas_call(
        gated_fusion_kernel,
        out_shape=jax.ShapeDtypeStruct((Bp, struct_dim), z_struct.dtype),
        grid_spec=pltpu.PrefetchScalarGridSpec(
            num_scalar_prefetch=0,
            grid=grid,
            in_specs=[
                pl.BlockSpec((tb, struct_dim), lambda i: (i, 0)),        # z_struct
                pl.BlockSpec((tb, text_dim), lambda i: (i, 0)),          # z_text
                # Constant index_map: block is revisited every step, so Pallas
                # does not re-DMA the weight/bias per grid step.
                pl.BlockSpec((struct_dim, text_dim), lambda i: (0, 0)),  # W
                pl.BlockSpec((1, struct_dim), lambda i: (0, 0)),         # bias
            ],
            out_specs=pl.BlockSpec((tb, struct_dim), lambda i: (i, 0)),
        ),
        compiler_params=pltpu.CompilerParams(
            dimension_semantics=("parallel",),   # batch axis shardable on v7x
            vmem_limit_bytes=vmem_limit,
        ),
    )(z_struct, z_text, weight, b2d)

    if Bp != B:
        out = out[:B]
    return out


if __name__ == "__main__":
    # Small but lane-dense shapes: feature dims are multiples of 128 so every
    # load/store is a full-lane access; B=250 exercises the tail-padding path
    # and yields a 2-step parallel grid (tb=128).
    B, struct_dim, text_dim = 250, 128, 128

    key = jax.random.PRNGKey(0)
    k1, k2, k3, k4 = jax.random.split(key, 4)
    z_struct = jax.random.normal(k1, (B, struct_dim), dtype=jnp.float32)
    z_text = jax.random.normal(k2, (B, text_dim), dtype=jnp.float32)
    # Deterministic parameter init (mimics nn.Linear uniform bound 1/sqrt(fan_in)).
    bound = 1.0 / (text_dim ** 0.5)
    weight = jax.random.uniform(k3, (struct_dim, text_dim),
                                minval=-bound, maxval=bound, dtype=jnp.float32)
    bias = jax.random.uniform(k4, (struct_dim,),
                              minval=-bound, maxval=bound, dtype=jnp.float32)

    out = gated_fusion(z_struct, z_text, weight, bias)
    out = jax.block_until_ready(out)

    # Pure-JAX reference for sanity.
    ref = z_struct * jax.nn.sigmoid(z_text @ weight.T + bias) + z_struct
    assert out.shape == ref.shape
    assert jnp.allclose(out, ref, atol=1e-5, rtol=1e-5), "mismatch vs reference"

    print("KERNEL_OK")
</pallas_src>

<mosaic_0001>
module attributes {stable_mosaic.version = 11 : i64} {
  func.func @gated_fusion_kernel(%arg0: i32, %arg1: memref<128x128xf32, #tpu.memory_space<vmem>>, %arg2: memref<128x128xf32, #tpu.memory_space<vmem>>, %arg3: memref<128x128xf32, #tpu.memory_space<vmem>>, %arg4: memref<1x128xf32, #tpu.memory_space<vmem>>, %arg5: memref<128x128xf32, #tpu.memory_space<vmem>>) attributes {dimension_semantics = [#tpu.dimension_semantics<parallel>], iteration_bounds = array<i64: 2>, scalar_prefetch = 0 : i64, scratch_operands = 0 : i64, tpu.core_type = #tpu.core_type<tc>, window_params = [{transform_indices = @transform_0, window_bounds = array<i64: 128, 128>}, {transform_indices = @transform_1, window_bounds = array<i64: 128, 128>}, {pipeline_mode = #tpu.pipeline_mode<synchronous>, transform_indices = @transform_2, window_bounds = array<i64: 128, 128>}, {pipeline_mode = #tpu.pipeline_mode<synchronous>, transform_indices = @transform_3, window_bounds = array<i64: 1, 128>}, {transform_indices = @transform_4, window_bounds = array<i64: 128, 128>}]} {
    %c0 = arith.constant 0 : index
    %c0_0 = arith.constant 0 : index
    %0 = vector.load %arg2[%c0, %c0_0] : memref<128x128xf32, #tpu.memory_space<vmem>>, vector<128x128xf32>
    %c0_1 = arith.constant 0 : index
    %c0_2 = arith.constant 0 : index
    %1 = vector.load %arg3[%c0_1, %c0_2] : memref<128x128xf32, #tpu.memory_space<vmem>>, vector<128x128xf32>
    %cst = arith.constant dense<0.000000e+00> : vector<128x128xf32>
    %2 = tpu.matmul %0, %1, %cst {dimension_numbers = #tpu.dot_dimension_numbers<[1], [1], [0], [0], [0, 0, 1, 0], [], []>} : vector<128x128xf32>, vector<128x128xf32>, vector<128x128xf32> -> vector<128x128xf32>
    %c0_3 = arith.constant 0 : index
    %c0_4 = arith.constant 0 : index
    %3 = vector.load %arg4[%c0_3, %c0_4] : memref<1x128xf32, #tpu.memory_space<vmem>>, vector<1x128xf32>
    %4 = vector.broadcast %3 : vector<1x128xf32> to vector<128x128xf32>
    %5 = arith.addf %2, %4 : vector<128x128xf32>
    %6 = arith.negf %5 : vector<128x128xf32>
    %7 = math.exp %6 : vector<128x128xf32>
    %cst_5 = arith.constant 1.000000e+00 : f32
    %8 = vector.broadcast %cst_5 : f32 to vector<128x128xf32>
    %9 = arith.addf %8, %7 : vector<128x128xf32>
    %10 = arith.divf %8, %9 : vector<128x128xf32>
    %c0_6 = arith.constant 0 : index
    %c0_7 = arith.constant 0 : index
    %11 = vector.load %arg1[%c0_6, %c0_7] : memref<128x128xf32, #tpu.memory_space<vmem>>, vector<128x128xf32>
    %cst_8 = arith.constant 1.000000e+00 : f32
    %12 = vector.broadcast %cst_8 : f32 to vector<128x128xf32>
    %13 = arith.addf %10, %12 : vector<128x128xf32>
    %14 = arith.mulf %11, %13 : vector<128x128xf32>
    %c0_9 = arith.constant 0 : index
    %c0_10 = arith.constant 0 : index
    %15 = vector.load %arg5[%c0_9, %c0_10] : memref<128x128xf32, #tpu.memory_space<vmem>>, vector<128x128xf32>
    tpu.vector_store %arg5[%c0_9, %c0_10], %14 {strides = array<i32>} : memref<128x128xf32, #tpu.memory_space<vmem>>, vector<128x128xf32>,
    return
  }
  func.func @transform_0(%arg0: i32) -> (i32, i32) {
    %c0_i32 = arith.constant 0 : i32
    %c0_i32_0 = arith.constant 0 : i32
    return %arg0, %c0_i32 : i32, i32
  }
  func.func @transform_1(%arg0: i32) -> (i32, i32) {
    %c0_i32 = arith.constant 0 : i32
    %c0_i32_0 = arith.constant 0 : i32
    return %arg0, %c0_i32 : i32, i32
  }
  func.func @transform_2(%arg0: i32) -> (i32, i32) {
    %c0_i32 = arith.constant 0 : i32
    %c0_i32_0 = arith.constant 0 : i32
    %c0_i32_1 = arith.constant 0 : i32
    return %c0_i32, %c0_i32_0 : i32, i32
  }
  func.func @transform_3(%arg0: i32) -> (i32, i32) {
    %c0_i32 = arith.constant 0 : i32
    %c0_i32_0 = arith.constant 0 : i32
    %c0_i32_1 = arith.constant 0 : i32
    return %c0_i32, %c0_i32_0 : i32, i32
  }
  func.func @transform_4(%arg0: i32) -> (i32, i32) {
    %c0_i32 = arith.constant 0 : i32
    %c0_i32_0 = arith.constant 0 : i32
    return %arg0, %c0_i32 : i32, i32
  }
}

</mosaic_0001>

<llo_original>
// kernel: tpu_custom_call.1
$region0: #{tpu_custom_call.1}
  #allocation0 [shape = 'u32[]', space=smem, size = 0x4, offset = 0x4, fixed_abs, tag = 'smem constant byte address 0x4 - core index']
  #allocation1 [shape = 'u32[72,128]{1,0:T(1,128)}', space=vmem, size = 0x9000, scoped, tag = 'internal scratch']
  %s0 = inlined_call_operand.hbm [shape: f32[256,128], index: 0, kind: input, shape index: {}]
  %s1 = inlined_call_operand.hbm [shape: f32[256,128], index: 1, kind: input, shape index: {}]
  %s2 = inlined_call_operand.hbm [shape: f32[128,128], index: 2, kind: input, shape index: {}]
  %s3 = inlined_call_operand.vmem [shape: f32[1,128], index: 3, kind: input, shape index: {}]
  %s4 = inlined_call_operand.hbm [shape: f32[256,128], index: 4, kind: output, shape index: {}]
  %s5 = sld [smem:[#allocation0]]
  $region61: #{tpu_custom_call.1} parent=0
    _
  %s7 = ssub.s32 1, %s5
  %s8 = scalar_select 0, %s7, %s5
  $region1: #{tpu_custom_call.1} parent=0
    #allocation2 [shape = 'u8[131072]{0}', space=vmem, size = 0x20000, scoped, tag = 'input window, operand 0']
    #allocation3 [shape = 's32[2]{0}', space=sflag, size = 0x8, scoped, tag = 'scoped memory for tpu_custom_call.1']
    #allocation4 [shape = 's32[2]{0}', space=sflag, size = 0x8, scoped, tag = 'scoped memory for tpu_custom_call.1']
    #allocation5 [shape = 'u8[131072]{0}', space=vmem, size = 0x20000, scoped, tag = 'input window, operand 1']
    #allocation6 [shape = 's32[2]{0}', space=sflag, size = 0x8, scoped, tag = 'scoped memory for tpu_custom_call.1']
    #allocation7 [shape = 'u8[65536]{0}', space=vmem, size = 0x10000, scoped, tag = 'input window, operand 2, single buffered']
    #allocation8 [shape = 'u8[131072]{0}', space=vmem, size = 0x20000, scoped, tag = 'output window, operand 0']
    %9 = vsyncpa [#allocation3], 0
    %s10 = scalar_lea.sflag [#allocation3], 1
    %11 = vsyncpa %s10, 0
    %12 = vsyncpa [#allocation6], 0
    %s13 = scalar_lea.sflag [#allocation6], 1
    %14 = vsyncpa %s13, 0
    %15 = vsyncpa [#allocation4], 0
    %s16 = scalar_lea.sflag [#allocation4], 1
    %17 = vsyncpa %s16, 0
    loop: start=0, step=1, limit=4
    $region2: #{tpu_custom_call.1} parent=1 // loop_pre_header
      _
    $region3: #{tpu_custom_call.1} parent=1 // loop_header
      %s19 = sphi 0, %s23
      %p20 = scmp.ge.s32.totalorder %s19, 4
      %s29 = sphi 0, %s31
      %s32 = sphi 0, %s29
      %s33 = sphi 0, %s32
      %s49 = sphi 0, %s33
      %s55 = sphi 0, %s57
      %s58 = sphi 0, %s55
      %s59 = sphi 0, %s58
      %s75 = sphi 0, %s59
      %s79 = sphi 0, %s79
      %s81 = sphi 0, %s79
      %s82 = sphi 0, %s81
      %s96 = sphi 0, %s82
      %s100 = sphi 0, %s100
      %s102 = sphi 0, %s100
      %s103 = sphi 0, %s102
      %s117 = sphi 0, %s103
      %s123 = sphi 0, %s125
      %s126 = sphi 0, %s123
      %s127 = sphi 0, %s126
      %s143 = sphi 0, %s127
    $region4: #{tpu_custom_call.1} parent=1 // loop_header_branch
      %22 = sbr.rel (%p20) target = $region8
    $region5: #{tpu_custom_call.1} parent=1 // loop_body
      %s24 = ssub.s32 %s19, 1
      %s25 = ssub.s32 %s19, 2
      %s26 = sadd.s32 %s19, 1
      %s27 = ssub.s32 %s19, %s26
      %p28 = scmp.eq.s32.totalorder %s27, 0
      %s30 = sadd.s32 %s29, 1
      %s31 = scalar_select %p28, %s29, %s30
      %p34 = pneg %p28
      %p35 = scmp.eq.s32.totalorder %s19, 1
      %p36 = por %p34, %p35
      %p37 = scmp.ne.s32.totalorder %s29, %s32
      %p38 = scmp.eq.s32.totalorder %s19, 0
      %p39 = por %p37, %p38
      %p40 = scmp.ne.s32.totalorder %s29, %s32
      %p41 = scmp.eq.s32.totalorder %s24, 1
      %p42 = por %p40, %p41
      %p43 = scmp.ne.s32.totalorder %s32, %s33
      %p44 = scmp.eq.s32.totalorder %s24, 0
      %p45 = por %p43, %p44
      %p46 = scmp.ne.s32.totalorder %s32, %s33
      %p47 = scmp.eq.s32.totalorder %s25, 1
      %p48 = por %p46, %p47
      %p50 = scmp.ne.s32.totalorder %s33, %s49
      %p51 = scmp.eq.s32.totalorder %s25, 0
      %p52 = por %p50, %p51
      %s53 = ssub.s32 %s19, %s26
      %p54 = scmp.eq.s32.totalorder %s53, 0
      %s56 = sadd.s32 %s55, 1
      %s57 = scalar_select %p54, %s55, %s56
      %p60 = pneg %p54
      %p61 = scmp.eq.s32.totalorder %s19, 1
      %p62 = por %p60, %p61
      %p63 = scmp.ne.s32.totalorder %s55, %s58
      %p64 = scmp.eq.s32.totalorder %s19, 0
      %p65 = por %p63, %p64
      %p66 = scmp.ne.s32.totalorder %s55, %s58
      %p67 = scmp.eq.s32.totalorder %s24, 1
      %p68 = por %p66, %p67
      %p69 = scmp.ne.s32.totalorder %s58, %s59
      %p70 = scmp.eq.s32.totalorder %s24, 0
      %p71 = por %p69, %p70
      %p72 = scmp.ne.s32.totalorder %s58, %s59
      %p73 = scmp.eq.s32.totalorder %s25, 1
      %p74 = por %p72, %p73
      %p76 = scmp.ne.s32.totalorder %s59, %s75
      %p77 = scmp.eq.s32.totalorder %s25, 0
      %p78 = por %p76, %p77
      %s80 = sadd.s32 %s79, 1
      %p83 = scmp.eq.s32.totalorder %s19, 1
      %p84 = scmp.ne.s32.totalorder %s79, %s81
      %p85 = scmp.eq.s32.totalorder %s19, 0
      %p86 = por %p84, %p85
      %p87 = scmp.ne.s32.totalorder %s79, %s81
      %p88 = scmp.eq.s32.totalorder %s24, 1
      %p89 = por %p87, %p88
      %p90 = scmp.ne.s32.totalorder %s81, %s82
      %p91 = scmp.eq.s32.totalorder %s24, 0
      %p92 = por %p90, %p91
      %p93 = scmp.ne.s32.totalorder %s81, %s82
      %p94 = scmp.eq.s32.totalorder %s25, 1
      %p95 = por %p93, %p94
      %p97 = scmp.ne.s32.totalorder %s82, %s96
      %p98 = scmp.eq.s32.totalorder %s25, 0
      %p99 = por %p97, %p98
      %s101 = sadd.s32 %s100, 1
      %p104 = scmp.eq.s32.totalorder %s19, 1
      %p105 = scmp.ne.s32.totalorder %s100, %s102
      %p106 = scmp.eq.s32.totalorder %s19, 0
      %p107 = por %p105, %p106
      %p108 = scmp.ne.s32.totalorder %s100, %s102
      %p109 = scmp.eq.s32.totalorder %s24, 1
      %p110 = por %p108, %p109
      %p111 = scmp.ne.s32.totalorder %s102, %s103
      %p112 = scmp.eq.s32.totalorder %s24, 0
      %p113 = por %p111, %p112
      %p114 = scmp.ne.s32.totalorder %s102, %s103
      %p115 = scmp.eq.s32.totalorder %s25, 1
      %p116 = por %p114, %p115
      %p118 = scmp.ne.s32.totalorder %s103, %s117
      %p119 = scmp.eq.s32.totalorder %s25, 0
      %p120 = por %p118, %p119
      %s121 = ssub.s32 %s19, %s26
      %p122 = scmp.eq.s32.totalorder %s121, 0
      %s124 = sadd.s32 %s123, 1
      %s125 = scalar_select %p122, %s123, %s124
      %p128 = pneg %p122
      %p129 = scmp.eq.s32.totalorder %s19, 1
      %p130 = por %p128, %p129
      %p131 = scmp.ne.s32.totalorder %s123, %s126
      %p132 = scmp.eq.s32.totalorder %s19, 0
      %p133 = por %p131, %p132
      %p134 = scmp.ne.s32.totalorder %s123, %s126
      %p135 = scmp.eq.s32.totalorder %s24, 1
      %p136 = por %p134, %p135
      %p137 = scmp.ne.s32.totalorder %s126, %s127
      %p138 = scmp.eq.s32.totalorder %s24, 0
      %p139 = por %p137, %p138
      %p140 = scmp.ne.s32.totalorder %s126, %s127
      %p141 = scmp.eq.s32.totalorder %s25, 1
      %p142 = por %p140, %p141
      %p144 = scmp.ne.s32.totalorder %s127, %s143
      %p145 = scmp.eq.s32.totalorder %s25, 0
      %p146 = por %p144, %p145
      %p147 = scmp.le.s32.totalorder 1, %s19
      %p148 = scmp.lt.s32.totalorder %s19, 3
      %p149 = pnand %p147, %p148
      %p150 = pneg %p149
      // Predicated region
      $region9: #{tpu_custom_call.1} parent=5 // pred_check
        _
      $region10: #{tpu_custom_call.1} parent=5 // pred_check_branch
        %152 = sbr.rel (%p149) target = $region12
      $region11: #{tpu_custom_call.1} parent=5 // pred_region
        %s153 = ssub.s32 %s19, 1
        // Predicated region
        $region13: #{tpu_custom_call.1} parent=11 // pred_check
          %p154 = pneg %p92
        $region14: #{tpu_custom_call.1} parent=11 // pred_check_branch
          %156 = sbr.rel (%p154) target = $region16
        $region15: #{tpu_custom_call.1} parent=11 // pred_region
          %158 = vsyncadd [#allocation6], 0
          %s159 = sshll.u32 %s2, 4
          %s160 = int_to_ptr.hbm [resolvable:$true] %s159
          %s161 = sshll.u32 [#allocation7], 4
          %s162 = int_to_ptr.vmem [resolvable:$true] %s161
          %167 = dma.hbm_to_vmem [thread:$0]  %s160, 2048, %s162, [#allocation6], 128, 128, 8
        $region16: #{tpu_custom_call.1} parent=11 // pred_fallthru
          _
        // Predicated region
        $region17: #{tpu_custom_call.1} parent=11 // pred_check
          %p168 = pneg %p113
        $region18: #{tpu_custom_call.1} parent=11 // pred_check_branch
          %170 = sbr.rel (%p168) target = $region20
        $region19: #{tpu_custom_call.1} parent=11 // pred_region
          _
        $region20: #{tpu_custom_call.1} parent=11 // pred_fallthru
          _
      $region12: #{tpu_custom_call.1} parent=5 // pred_fallthru
        _
      %p171 = scmp.lt.s32.totalorder %s19, 2
      // Predicated region
      $region21: #{tpu_custom_call.1} parent=5 // pred_check
        %p172 = pneg %p171
      $region22: #{tpu_custom_call.1} parent=5 // pred_check_branch
        %174 = sbr.rel (%p172) target = $region24
      $region23: #{tpu_custom_call.1} parent=5 // pred_region
        // Predicated region
        $region25: #{tpu_custom_call.1} parent=23 // pred_check
          %p175 = pneg %p39
        $region26: #{tpu_custom_call.1} parent=23 // pred_check_branch
          %177 = sbr.rel (%p175) target = $region28
        $region27: #{tpu_custom_call.1} parent=23 // pred_region
          %s178 = sand.u32 %s29, 1
          %s179 = scalar_lea.sflag [#allocation3], %s178
          %s180 = sand.u32 %s29, 1
          %s181 = smul.addr %s180, 128
          %s182 = scalar_lea.vmem [#allocation2], %s181
          %s183 = smul.u32 16, %s19
          %185 = vsyncadd %s179, 0
          %s186 = smul.addr %s183, 8
          %s187 = scalar_lea.hbm %s0, %s186
          %s188 = sshll.u32 %s187, 4
          %s189 = int_to_ptr.hbm [resolvable:$true] %s188
          %s190 = sshll.u32 %s182, 4
          %s191 = int_to_ptr.vmem [resolvable:$true] %s190
          %196 = dma.hbm_to_vmem [thread:$0]  %s189, 2048, %s191, %s179, 128, 128, 8
        $region28: #{tpu_custom_call.1} parent=23 // pred_fallthru
          _
        // Predicated region
        $region29: #{tpu_custom_call.1} parent=23 // pred_check
          %p197 = pneg %p65
        $region30: #{tpu_custom_call.1} parent=23 // pred_check_branch
          %199 = sbr.rel (%p197) target = $region32
        $region31: #{tpu_custom_call.1} parent=23 // pred_region
          %s200 = sand.u32 %s19, 1
          %s201 = scalar_lea.sflag [#allocation6], %s200
          %s202 = sand.u32 %s55, 1
          %s203 = smul.addr %s202, 128
          %s204 = scalar_lea.vmem [#allocation5], %s203
          %s205 = smul.u32 16, %s19
          %207 = vsyncadd %s201, 0
          %s208 = smul.addr %s205, 8
          %s209 = scalar_lea.hbm %s1, %s208
          %s210 = sshll.u32 %s209, 4
          %s211 = int_to_ptr.hbm [resolvable:$true] %s210
          %s212 = sshll.u32 %s204, 4
          %s213 = int_to_ptr.vmem [resolvable:$true] %s212
          %218 = dma.hbm_to_vmem [thread:$0]  %s211, 2048, %s213, %s201, 128, 128, 8
        $region32: #{tpu_custom_call.1} parent=23 // pred_fallthru
          _
      $region24: #{tpu_custom_call.1} parent=5 // pred_fallthru
        _
      %p219 = scmp.le.s32.totalorder 1, %s19
      %p220 = scmp.lt.s32.totalorder %s19, 3
      %p221 = pnand %p219, %p220
      %p222 = pneg %p221
      // Predicated region
      $region33: #{tpu_custom_call.1} parent=5 // pred_check
        _
      $region34: #{tpu_custom_call.1} parent=5 // pred_check_branch
        %224 = sbr.rel (%p221) target = $region36
      $region35: #{tpu_custom_call.1} parent=5 // pred_region
        %s225 = ssub.s32 %s19, 1
        %s226 = sand.u32 %s32, 1
        %s227 = scalar_lea.sflag [#allocation3], %s226
        %s228 = sand.u32 %s32, 1
        %s229 = smul.addr %s228, 128
        %s230 = scalar_lea.vmem [#allocation2], %s229
        // Predicated region
        $region37: #{tpu_custom_call.1} parent=35 // pred_check
          %p231 = pneg %p45
        $region38: #{tpu_custom_call.1} parent=35 // pred_check_branch
          %233 = sbr.rel (%p231) target = $region40
        $region39: #{tpu_custom_call.1} parent=35 // pred_region
          %235 = dma.done %s227, 2048
        $region40: #{tpu_custom_call.1} parent=35 // pred_fallthru
          _
        %s236 = sand.u32 %s24, 1
        %s237 = scalar_lea.sflag [#allocation6], %s236
        %s238 = sand.u32 %s58, 1
        %s239 = smul.addr %s238, 128
        %s240 = scalar_lea.vmem [#allocation5], %s239
        // Predicated region
        $region41: #{tpu_custom_call.1} parent=35 // pred_check
          %p241 = pneg %p71
        $region42: #{tpu_custom_call.1} parent=35 // pred_check_branch
          %243 = sbr.rel (%p241) target = $region44
        $region43: #{tpu_custom_call.1} parent=35 // pred_region
          %245 = dma.done %s237, 2048
        $region44: #{tpu_custom_call.1} parent=35 // pred_fallthru
          _
        // Predicated region
        $region45: #{tpu_custom_call.1} parent=35 // pred_check
          %p246 = pneg %p92
        $region46: #{tpu_custom_call.1} parent=35 // pred_check_branch
          %248 = sbr.rel (%p246) target = $region48
        $region47: #{tpu_custom_call.1} parent=35 // pred_region
          %250 = dma.done [#allocation6], 2048
        $region48: #{tpu_custom_call.1} parent=35 // pred_fallthru
          _
        %s251 = sand.u32 %s32, 1
        %s252 = scalar_lea.sflag [#allocation3], %s251
        %s253 = sand.u32 %s32, 1
        %s254 = smul.addr %s253, 128
        %s255 = scalar_lea.vmem [#allocation2], %s254
        %p256 = pneg %p45
        %p257 = pneg %p42
        %s258 = sand.u32 %s24, 1
        %s259 = scalar_lea.sflag [#allocation6], %s258
        %s260 = sand.u32 %s58, 1
        %s261 = smul.addr %s260, 128
        %s262 = scalar_lea.vmem [#allocation5], %s261
        %p263 = pneg %p71
        %p264 = pneg %p68
        %p265 = pneg %p92
        %p266 = pneg %p89
        %p267 = pneg %p113
        %p268 = pneg %p110
        %p269 = pneg %p139
        %p270 = pneg %p136
        %s271 = sand.u32 %s126, 1
        %s272 = scalar_lea.sflag [#allocation4], %s271
        %s273 = sand.u32 %s126, 1
        %s274 = smul.addr %s273, 128
        %s275 = scalar_lea.vmem [#allocation8], %s274
        %s276 = smul.u32 16, %s24
        %s277 = smul.u32 16, %s24
        %s278 = smul.u32 16, %s24
        %v279 = vld [vmem:[%s240] sm:$0xff]
        %v280 = vld [vmem:[%s240 + $0x8] sm:$0xff]
        %v281 = vld [vmem:[%s240 + $0x10] sm:$0xff]
        %v282 = vld [vmem:[%s240 + $0x18] sm:$0xff]
        %v283 = vld [vmem:[%s240 + $0x20] sm:$0xff]
        %v284 = vld [vmem:[%s240 + $0x28] sm:$0xff]
        %v285 = vld [vmem:[%s240 + $0x30] sm:$0xff]
        %v286 = vld [vmem:[%s240 + $0x38] sm:$0xff]
        %v287 = vld [vmem:[%s240 + $0x40] sm:$0xff]
        %v288 = vld [vmem:[%s240 + $0x48] sm:$0xff]
        %v289 = vld [vmem:[%s240 + $0x50] sm:$0xff]
        %v290 = vld [vmem:[%s240 + $0x58] sm:$0xff]
        %v291 = vld [vmem:[%s240 + $0x60] sm:$0xff]
        %v292 = vld [vmem:[%s240 + $0x68] sm:$0xff]
        %v293 = vld [vmem:[%s240 + $0x70] sm:$0xff]
        %v294 = vld [vmem:[%s240 + $0x78] sm:$0xff]
        %v295 = vld [vmem:[#allocation7] sm:$0xff]
        %v296 = vld [vmem:[#allocation7 + $0x8] sm:$0xff]
        %v297 = vld [vmem:[#allocation7 + $0x10] sm:$0xff]
        %v298 = vld [vmem:[#allocation7 + $0x18] sm:$0xff]
        %v299 = vld [vmem:[#allocation7 + $0x20] sm:$0xff]
        %v300 = vld [vmem:[#allocation7 + $0x28] sm:$0xff]
        %v301 = vld [vmem:[#allocation7 + $0x30] sm:$0xff]
        %v302 = vld [vmem:[#allocation7 + $0x38] sm:$0xff]
        %v303 = vld [vmem:[#allocation7 + $0x40] sm:$0xff]
        %v304 = vld [vmem:[#allocation7 + $0x48] sm:$0xff]
        %v305 = vld [vmem:[#allocation7 + $0x50] sm:$0xff]
        %v306 = vld [vmem:[#allocation7 + $0x58] sm:$0xff]
        %v307 = vld [vmem:[#allocation7 + $0x60] sm:$0xff]
        %v308 = vld [vmem:[#allocation7 + $0x68] sm:$0xff]
        %v309 = vld [vmem:[#allocation7 + $0x70] sm:$0xff]
        %v310 = vld [vmem:[#allocation7 + $0x78] sm:$0xff]
        %v311 = vld [vmem:[%s3] sm:$0x1]
        %v313 = vperm.slane %v311, 0
        %315 = vmatpush.xpose.msra.mxu0 %v310
        %316 = vmatpush.xpose.msra.mxu0 %v309
        %317 = vmatpush.xpose.msra.mxu0 %v308
        %318 = vmatpush.xpose.msra.mxu0 %v307
        %319 = vmatpush.xpose.msra.mxu0 %v306
        %320 = vmatpush.xpose.msra.mxu0 %v305
        %321 = vmatpush.xpose.msra.mxu0 %v304
        %322 = vmatpush.xpose.msra.mxu0 %v303
        %323 = vmatpush.xpose.msra.mxu0 %v302
        %324 = vmatpush.xpose.msra.mxu0 %v301
        %325 = vmatpush.xpose.msra.mxu0 %v300
        %326 = vmatpush.xpose.msra.mxu0 %v299
        %327 = vmatpush.xpose.msra.mxu0 %v298
        %328 = vmatpush.xpose.msra.mxu0 %v297
        %329 = vmatpush.xpose.msra.mxu0 %v296
        %330 = vmatpush.xpose.msra.mxu0 %v295
        %331 = vmatmul.f32.gmra.mxu0 %v279
        %v332 = vpop.f32.mrf.mxu0
        %v333 = vadd.f32 %v313, %v332
        %334 = vmatmul.f32.gmra.mxu0 %v280
        %v335 = vpop.f32.mrf.mxu0
        %v336 = vadd.f32 %v313, %v335
        %337 = vmatmul.f32.gmra.mxu0 %v281
        %v338 = vpop.f32.mrf.mxu0
        %v339 = vadd.f32 %v313, %v338
        %340 = vmatmul.f32.gmra.mxu0 %v282
        %v341 = vpop.f32.mrf.mxu0
        %v342 = vadd.f32 %v313, %v341
        %343 = vmatmul.f32.gmra.mxu0 %v283
        %v344 = vpop.f32.mrf.mxu0
        %v345 = vadd.f32 %v313, %v344
        %346 = vmatmul.f32.gmra.mxu0 %v284
        %v347 = vpop.f32.mrf.mxu0
        %v348 = vadd.f32 %v313, %v347
        %349 = vmatmul.f32.gmra.mxu0 %v285
        %v350 = vpop.f32.mrf.mxu0
        %v351 = vadd.f32 %v313, %v350
        %352 = vmatmul.f32.gmra.mxu0 %v286
        %v353 = vpop.f32.mrf.mxu0
        %v354 = vadd.f32 %v313, %v353
        %355 = vmatmul.f32.gmra.mxu0 %v287
        %v356 = vpop.f32.mrf.mxu0
        %v357 = vadd.f32 %v313, %v356
        %358 = vmatmul.f32.gmra.mxu0 %v288
        %v359 = vpop.f32.mrf.mxu0
        %v360 = vadd.f32 %v313, %v359
        %361 = vmatmul.f32.gmra.mxu0 %v289
        %v362 = vpop.f32.mrf.mxu0
        %v363 = vadd.f32 %v313, %v362
        %364 = vmatmul.f32.gmra.mxu0 %v290
        %v365 = vpop.f32.mrf.mxu0
        %v366 = vadd.f32 %v313, %v365
        %367 = vmatmul.f32.gmra.mxu0 %v291
        %v368 = vpop.f32.mrf.mxu0
        %v369 = vadd.f32 %v313, %v368
        %370 = vmatmul.f32.gmra.mxu0 %v292
        %v371 = vpop.f32.mrf.mxu0
        %v372 = vadd.f32 %v313, %v371
        %373 = vmatmul.f32.gmra.mxu0 %v293
        %v374 = vpop.f32.mrf.mxu0
        %v375 = vadd.f32 %v313, %v374
        %376 = vmatmul.f32.gmra.mxu0 %v294
        %v377 = vpop.f32.mrf.mxu0
        %v378 = vadd.f32 %v313, %v377
        %379 = vdwg.mxu0
        %v380 = vxor.u32 %v333, 2147483648
        %v381 = vxor.u32 %v336, 2147483648
        %v382 = vxor.u32 %v339, 2147483648
        %v383 = vxor.u32 %v342, 2147483648
        %v384 = vxor.u32 %v345, 2147483648
        %v385 = vxor.u32 %v348, 2147483648
        %v386 = vxor.u32 %v351, 2147483648
        %v387 = vxor.u32 %v354, 2147483648
        %v388 = vxor.u32 %v357, 2147483648
        %v389 = vxor.u32 %v360, 2147483648
        %v390 = vxor.u32 %v363, 2147483648
        %v391 = vxor.u32 %v366, 2147483648
        %v392 = vxor.u32 %v369, 2147483648
        %v393 = vxor.u32 %v372, 2147483648
        %v394 = vxor.u32 %v375, 2147483648
        %v395 = vxor.u32 %v378, 2147483648
        %v396 = vmul.f32 %v380, 1.442695
        %v397 = vpow.pop %v396
        %v398 = vmul.f32 %v381, 1.442695
        %v399 = vpow.pop %v398
        %v400 = vmul.f32 %v382, 1.442695
        %v401 = vpow.pop %v400
        %v402 = vmul.f32 %v383, 1.442695
        %v403 = vpow.pop %v402
        %v404 = vmul.f32 %v384, 1.442695
        %v405 = vpow.pop %v404
        %v406 = vmul.f32 %v385, 1.442695
        %v407 = vpow.pop %v406
        %v408 = vmul.f32 %v386, 1.442695
        %v409 = vpow.pop %v408
        %v410 = vmul.f32 %v387, 1.442695
        %v411 = vpow.pop %v410
        %v412 = vmul.f32 %v388, 1.442695
        %v413 = vpow.pop %v412
        %v414 = vmul.f32 %v389, 1.442695
        %v415 = vpow.pop %v414
        %v416 = vmul.f32 %v390, 1.442695
        %v417 = vpow.pop %v416
        %v418 = vmul.f32 %v391, 1.442695
        %v419 = vpow.pop %v418
        %v420 = vmul.f32 %v392, 1.442695
        %v421 = vpow.pop %v420
        %v422 = vmul.f32 %v393, 1.442695
        %v423 = vpow.pop %v422
        %v424 = vmul.f32 %v394, 1.442695
        %v425 = vpow.pop %v424
        %v426 = vmul.f32 %v395, 1.442695
        %v427 = vpow.pop %v426
        %v428 = vadd.f32 %v397, 1.0
        %v429 = vadd.f32 %v399, 1.0
        %v430 = vadd.f32 %v401, 1.0
        %v431 = vadd.f32 %v403, 1.0
        %v432 = vadd.f32 %v405, 1.0
        %v433 = vadd.f32 %v407, 1.0
        %v434 = vadd.f32 %v409, 1.0
        %v435 = vadd.f32 %v411, 1.0
        %v436 = vadd.f32 %v413, 1.0
        %v437 = vadd.f32 %v415, 1.0
        %v438 = vadd.f32 %v417, 1.0
        %v439 = vadd.f32 %v419, 1.0
        %v440 = vadd.f32 %v421, 1.0
        %v441 = vadd.f32 %v423, 1.0
        %v442 = vadd.f32 %v425, 1.0
        %v443 = vadd.f32 %v427, 1.0
        %v444 = vrcp.pop %v428
        %v445 = vmul.f32 %v428, %v444
        %v446 = vsub.f32 1.0, %v445
        %v447 = vmul.f32 %v444, %v446
        %v448 = vadd.f32 %v444, %v447
        %vm449 = vweird.f32 %v428
        %vm450 = vweird.f32 %v444
        %vm451 = vmor %vm449, %vm450
        %v452 = vsel %vm451, %v444, %v448
        %v453 = vand.u32 2147483647, %v428
        %vm454 = vcmp.eq.f32.partialorder %v453, 8.507059e+37
        %v455 = vand.u32 %v428, 2147483648
        %v456 = vor.u32 1.1754944e-38, %v455
        %v457 = vsel %vm454, %v456, %v452
        %v458 = vmul.f32 1.0, %v457
        %v459 = vrcp.pop %v429
        %v460 = vmul.f32 %v429, %v459
        %v461 = vsub.f32 1.0, %v460
        %v462 = vmul.f32 %v459, %v461
        %v463 = vadd.f32 %v459, %v462
        %vm464 = vweird.f32 %v429
        %vm465 = vweird.f32 %v459
        %vm466 = vmor %vm464, %vm465
        %v467 = vsel %vm466, %v459, %v463
        %v468 = vand.u32 2147483647, %v429
        %vm469 = vcmp.eq.f32.partialorder %v468, 8.507059e+37
        %v470 = vand.u32 %v429, 2147483648
        %v471 = vor.u32 1.1754944e-38, %v470
        %v472 = vsel %vm469, %v471, %v467
        %v473 = vmul.f32 1.0, %v472
        %v474 = vrcp.pop %v430
        %v475 = vmul.f32 %v430, %v474
        %v476 = vsub.f32 1.0, %v475
        %v477 = vmul.f32 %v474, %v476
        %v478 = vadd.f32 %v474, %v477
        %vm479 = vweird.f32 %v430
        %vm480 = vweird.f32 %v474
        %vm481 = vmor %vm479, %vm480
        %v482 = vsel %vm481, %v474, %v478
        %v483 = vand.u32 2147483647, %v430
        %vm484 = vcmp.eq.f32.partialorder %v483, 8.507059e+37
        %v485 = vand.u32 %v430, 2147483648
        %v486 = vor.u32 1.1754944e-38, %v485
        %v487 = vsel %vm484, %v486, %v482
        %v488 = vmul.f32 1.0, %v487
        %v489 = vrcp.pop %v431
        %v490 = vmul.f32 %v431, %v489
        %v491 = vsub.f32 1.0, %v490
        %v492 = vmul.f32 %v489, %v491
        %v493 = vadd.f32 %v489, %v492
        %vm494 = vweird.f32 %v431
        %vm495 = vweird.f32 %v489
        %vm496 = vmor %vm494, %vm495
        %v497 = vsel %vm496, %v489, %v493
        %v498 = vand.u32 2147483647, %v431
        %vm499 = vcmp.eq.f32.partialorder %v498, 8.507059e+37
        %v500 = vand.u32 %v431, 2147483648
        %v501 = vor.u32 1.1754944e-38, %v500
        %v502 = vsel %vm499, %v501, %v497
        %v503 = vmul.f32 1.0, %v502
        %v504 = vrcp.pop %v432
        %v505 = vmul.f32 %v432, %v504
        %v506 = vsub.f32 1.0, %v505
        %v507 = vmul.f32 %v504, %v506
        %v508 = vadd.f32 %v504, %v507
        %vm509 = vweird.f32 %v432
        %vm510 = vweird.f32 %v504
        %vm511 = vmor %vm509, %vm510
        %v512 = vsel %vm511, %v504, %v508
        %v513 = vand.u32 2147483647, %v432
        %vm514 = vcmp.eq.f32.partialorder %v513, 8.507059e+37
        %v515 = vand.u32 %v432, 2147483648
        %v516 = vor.u32 1.1754944e-38, %v515
        %v517 = vsel %vm514, %v516, %v512
        %v518 = vmul.f32 1.0, %v517
        %v519 = vrcp.pop %v433
        %v520 = vmul.f32 %v433, %v519
        %v521 = vsub.f32 1.0, %v520
        %v522 = vmul.f32 %v519, %v521
        %v523 = vadd.f32 %v519, %v522
        %vm524 = vweird.f32 %v433
        %vm525 = vweird.f32 %v519
        %vm526 = vmor %vm524, %vm525
        %v527 = vsel %vm526, %v519, %v523
        %v528 = vand.u32 2147483647, %v433
        %vm529 = vcmp.eq.f32.partialorder %v528, 8.507059e+37
        %v530 = vand.u32 %v433, 2147483648
        %v531 = vor.u32 1.1754944e-38, %v530
        %v532 = vsel %vm529, %v531, %v527
        %v533 = vmul.f32 1.0, %v532
        %v534 = vrcp.pop %v434
        %v535 = vmul.f32 %v434, %v534
        %v536 = vsub.f32 1.0, %v535
        %v537 = vmul.f32 %v534, %v536
        %v538 = vadd.f32 %v534, %v537
        %vm539 = vweird.f32 %v434
        %vm540 = vweird.f32 %v534
        %vm541 = vmor %vm539, %vm540
        %v542 = vsel %vm541, %v534, %v538
        %v543 = vand.u32 2147483647, %v434
        %vm544 = vcmp.eq.f32.partialorder %v543, 8.507059e+37
        %v545 = vand.u32 %v434, 2147483648
        %v546 = vor.u32 1.1754944e-38, %v545
        %v547 = vsel %vm544, %v546, %v542
        %v548 = vmul.f32 1.0, %v547
        %v549 = vrcp.pop %v435
        %v550 = vmul.f32 %v435, %v549
        %v551 = vsub.f32 1.0, %v550
        %v552 = vmul.f32 %v549, %v551
        %v553 = vadd.f32 %v549, %v552
        %vm554 = vweird.f32 %v435
        %vm555 = vweird.f32 %v549
        %vm556 = vmor %vm554, %vm555
        %v557 = vsel %vm556, %v549, %v553
        %v558 = vand.u32 2147483647, %v435
        %vm559 = vcmp.eq.f32.partialorder %v558, 8.507059e+37
        %v560 = vand.u32 %v435, 2147483648
        %v561 = vor.u32 1.1754944e-38, %v560
        %v562 = vsel %vm559, %v561, %v557
        %v563 = vmul.f32 1.0, %v562
        %v564 = vrcp.pop %v436
        %v565 = vmul.f32 %v436, %v564
        %v566 = vsub.f32 1.0, %v565
        %v567 = vmul.f32 %v564, %v566
        %v568 = vadd.f32 %v564, %v567
        %vm569 = vweird.f32 %v436
        %vm570 = vweird.f32 %v564
        %vm571 = vmor %vm569, %vm570
        %v572 = vsel %vm571, %v564, %v568
        %v573 = vand.u32 2147483647, %v436
        %vm574 = vcmp.eq.f32.partialorder %v573, 8.507059e+37
        %v575 = vand.u32 %v436, 2147483648
        %v576 = vor.u32 1.1754944e-38, %v575
        %v577 = vsel %vm574, %v576, %v572
        %v578 = vmul.f32 1.0, %v577
        %v579 = vrcp.pop %v437
        %v580 = vmul.f32 %v437, %v579
        %v581 = vsub.f32 1.0, %v580
        %v582 = vmul.f32 %v579, %v581
        %v583 = vadd.f32 %v579, %v582
        %vm584 = vweird.f32 %v437
        %vm585 = vweird.f32 %v579
        %vm586 = vmor %vm584, %vm585
        %v587 = vsel %vm586, %v579, %v583
        %v588 = vand.u32 2147483647, %v437
        %vm589 = vcmp.eq.f32.partialorder %v588, 8.507059e+37
        %v590 = vand.u32 %v437, 2147483648
        %v591 = vor.u32 1.1754944e-38, %v590
        %v592 = vsel %vm589, %v591, %v587
        %v593 = vmul.f32 1.0, %v592
        %v594 = vrcp.pop %v438
        %v595 = vmul.f32 %v438, %v594
        %v596 = vsub.f32 1.0, %v595
        %v597 = vmul.f32 %v594, %v596
        %v598 = vadd.f32 %v594, %v597
        %vm599 = vweird.f32 %v438
        %vm600 = vweird.f32 %v594
        %vm601 = vmor %vm599, %vm600
        %v602 = vsel %vm601, %v594, %v598
        %v603 = vand.u32 2147483647, %v438
        %vm604 = vcmp.eq.f32.partialorder %v603, 8.507059e+37
        %v605 = vand.u32 %v438, 2147483648
        %v606 = vor.u32 1.1754944e-38, %v605
        %v607 = vsel %vm604, %v606, %v602
        %v608 = vmul.f32 1.0, %v607
        %v609 = vrcp.pop %v439
        %v610 = vmul.f32 %v439, %v609
        %v611 = vsub.f32 1.0, %v610
        %v612 = vmul.f32 %v609, %v611
        %v613 = vadd.f32 %v609, %v612
        %vm614 = vweird.f32 %v439
        %vm615 = vweird.f32 %v609
        %vm616 = vmor %vm614, %vm615
        %v617 = vsel %vm616, %v609, %v613
        %v618 = vand.u32 2147483647, %v439
        %vm619 = vcmp.eq.f32.partialorder %v618, 8.507059e+37
        %v620 = vand.u32 %v439, 2147483648
        %v621 = vor.u32 1.1754944e-38, %v620
        %v622 = vsel %vm619, %v621, %v617
        %v623 = vmul.f32 1.0, %v622
        %v624 = vrcp.pop %v440
        %v625 = vmul.f32 %v440, %v624
        %v626 = vsub.f32 1.0, %v625
        %v627 = vmul.f32 %v624, %v626
        %v628 = vadd.f32 %v624, %v627
        %vm629 = vweird.f32 %v440
        %vm630 = vweird.f32 %v624
        %vm631 = vmor %vm629, %vm630
        %v632 = vsel %vm631, %v624, %v628
        %v633 = vand.u32 2147483647, %v440
        %vm634 = vcmp.eq.f32.partialorder %v633, 8.507059e+37
        %v635 = vand.u32 %v440, 2147483648
        %v636 = vor.u32 1.1754944e-38, %v635
        %v637 = vsel %vm634, %v636, %v632
        %v638 = vmul.f32 1.0, %v637
        %v639 = vrcp.pop %v441
        %v640 = vmul.f32 %v441, %v639
        %v641 = vsub.f32 1.0, %v640
        %v642 = vmul.f32 %v639, %v641
        %v643 = vadd.f32 %v639, %v642
        %vm644 = vweird.f32 %v441
        %vm645 = vweird.f32 %v639
        %vm646 = vmor %vm644, %vm645
        %v647 = vsel %vm646, %v639, %v643
        %v648 = vand.u32 2147483647, %v441
        %vm649 = vcmp.eq.f32.partialorder %v648, 8.507059e+37
        %v650 = vand.u32 %v441, 2147483648
        %v651 = vor.u32 1.1754944e-38, %v650
        %v652 = vsel %vm649, %v651, %v647
        %v653 = vmul.f32 1.0, %v652
        %v654 = vrcp.pop %v442
        %v655 = vmul.f32 %v442, %v654
        %v656 = vsub.f32 1.0, %v655
        %v657 = vmul.f32 %v654, %v656
        %v658 = vadd.f32 %v654, %v657
        %vm659 = vweird.f32 %v442
        %vm660 = vweird.f32 %v654
        %vm661 = vmor %vm659, %vm660
        %v662 = vsel %vm661, %v654, %v658
        %v663 = vand.u32 2147483647, %v442
        %vm664 = vcmp.eq.f32.partialorder %v663, 8.507059e+37
        %v665 = vand.u32 %v442, 2147483648
        %v666 = vor.u32 1.1754944e-38, %v665
        %v667 = vsel %vm664, %v666, %v662
        %v668 = vmul.f32 1.0, %v667
        %v669 = vrcp.pop %v443
        %v670 = vmul.f32 %v443, %v669
        %v671 = vsub.f32 1.0, %v670
        %v672 = vmul.f32 %v669, %v671
        %v673 = vadd.f32 %v669, %v672
        %vm674 = vweird.f32 %v443
        %vm675 = vweird.f32 %v669
        %vm676 = vmor %vm674, %vm675
        %v677 = vsel %vm676, %v669, %v673
        %v678 = vand.u32 2147483647, %v443
        %vm679 = vcmp.eq.f32.partialorder %v678, 8.507059e+37
        %v680 = vand.u32 %v443, 2147483648
        %v681 = vor.u32 1.1754944e-38, %v680
        %v682 = vsel %vm679, %v681, %v677
        %v683 = vmul.f32 1.0, %v682
        %v684 = vld [vmem:[%s230] sm:$0xff]
        %v685 = vld [vmem:[%s230 + $0x8] sm:$0xff]
        %v686 = vld [vmem:[%s230 + $0x10] sm:$0xff]
        %v687 = vld [vmem:[%s230 + $0x18] sm:$0xff]
        %v688 = vld [vmem:[%s230 + $0x20] sm:$0xff]
        %v689 = vld [vmem:[%s230 + $0x28] sm:$0xff]
        %v690 = vld [vmem:[%s230 + $0x30] sm:$0xff]
        %v691 = vld [vmem:[%s230 + $0x38] sm:$0xff]
        %v692 = vld [vmem:[%s230 + $0x40] sm:$0xff]
        %v693 = vld [vmem:[%s230 + $0x48] sm:$0xff]
        %v694 = vld [vmem:[%s230 + $0x50] sm:$0xff]
        %v695 = vld [vmem:[%s230 + $0x58] sm:$0xff]
        %v696 = vld [vmem:[%s230 + $0x60] sm:$0xff]
        %v697 = vld [vmem:[%s230 + $0x68] sm:$0xff]
        %v698 = vld [vmem:[%s230 + $0x70] sm:$0xff]
        %v699 = vld [vmem:[%s230 + $0x78] sm:$0xff]
        %v700 = vadd.f32 %v458, 1.0
        %v701 = vadd.f32 %v473, 1.0
        %v702 = vadd.f32 %v488, 1.0
        %v703 = vadd.f32 %v503, 1.0
        %v704 = vadd.f32 %v518, 1.0
        %v705 = vadd.f32 %v533, 1.0
        %v706 = vadd.f32 %v548, 1.0
        %v707 = vadd.f32 %v563, 1.0
        %v708 = vadd.f32 %v578, 1.0
        %v709 = vadd.f32 %v593, 1.0
        %v710 = vadd.f32 %v608, 1.0
        %v711 = vadd.f32 %v623, 1.0
        %v712 = vadd.f32 %v638, 1.0
        %v713 = vadd.f32 %v653, 1.0
        %v714 = vadd.f32 %v668, 1.0
        %v715 = vadd.f32 %v683, 1.0
        %v716 = vmul.f32 %v684, %v700
        %v717 = vmul.f32 %v685, %v701
        %v718 = vmul.f32 %v686, %v702
        %v719 = vmul.f32 %v687, %v703
        %v720 = vmul.f32 %v688, %v704
        %v721 = vmul.f32 %v689, %v705
        %v722 = vmul.f32 %v690, %v706
        %v723 = vmul.f32 %v691, %v707
        %v724 = vmul.f32 %v692, %v708
        %v725 = vmul.f32 %v693, %v709
        %v726 = vmul.f32 %v694, %v710
        %v727 = vmul.f32 %v695, %v711
        %v728 = vmul.f32 %v696, %v712
        %v729 = vmul.f32 %v697, %v713
        %v730 = vmul.f32 %v698, %v714
        %v731 = vmul.f32 %v699, %v715
        %732 = vst [vmem:[%s275] sm:$0xff] %v716
        %733 = vst [vmem:[%s275 + $0x8] sm:$0xff] %v717
        %734 = vst [vmem:[%s275 + $0x10] sm:$0xff] %v718
        %735 = vst [vmem:[%s275 + $0x18] sm:$0xff] %v719
        %736 = vst [vmem:[%s275 + $0x20] sm:$0xff] %v720
        %737 = vst [vmem:[%s275 + $0x28] sm:$0xff] %v721
        %738 = vst [vmem:[%s275 + $0x30] sm:$0xff] %v722
        %739 = vst [vmem:[%s275 + $0x38] sm:$0xff] %v723
        %740 = vst [vmem:[%s275 + $0x40] sm:$0xff] %v724
        %741 = vst [vmem:[%s275 + $0x48] sm:$0xff] %v725
        %742 = vst [vmem:[%s275 + $0x50] sm:$0xff] %v726
        %743 = vst [vmem:[%s275 + $0x58] sm:$0xff] %v727
        %744 = vst [vmem:[%s275 + $0x60] sm:$0xff] %v728
        %745 = vst [vmem:[%s275 + $0x68] sm:$0xff] %v729
        %746 = vst [vmem:[%s275 + $0x70] sm:$0xff] %v730
        %747 = vst [vmem:[%s275 + $0x78] sm:$0xff] %v731
        %s748 = sand.u32 %s126, 1
        %s749 = scalar_lea.sflag [#allocation4], %s748
        %s750 = sand.u32 %s126, 1
        %s751 = smul.addr %s750, 128
        %s752 = scalar_lea.vmem [#allocation8], %s751
        // Predicated region
        $region49: #{tpu_custom_call.1} parent=35 // pred_check
          %p753 = pneg %p136
        $region50: #{tpu_custom_call.1} parent=35 // pred_check_branch
          %755 = sbr.rel (%p753) target = $region52
        $region51: #{tpu_custom_call.1} parent=35 // pred_region
          %s756 = smul.u32 16, %s24
          %758 = vsyncadd %s749, 0
          %s759 = smul.addr %s756, 8
          %s760 = scalar_lea.hbm %s4, %s759
          %s761 = sshll.u32 %s752, 4
          %s762 = int_to_ptr.vmem [resolvable:$true] %s761
          %s763 = sshll.u32 %s760, 4
          %s764 = int_to_ptr.hbm [resolvable:$true] %s763
          %769 = dma.vmem_to_hbm [thread:$0]  %s762, 2048, %s764, %s749, 128, 128, 8
        $region52: #{tpu_custom_call.1} parent=35 // pred_fallthru
          _
      $region36: #{tpu_custom_call.1} parent=5 // pred_fallthru
        _
      %p770 = scmp.le.s32.totalorder 2, %s19
      // Predicated region
      $region53: #{tpu_custom_call.1} parent=5 // pred_check
        %p771 = pneg %p770
      $region54: #{tpu_custom_call.1} parent=5 // pred_check_branch
        %773 = sbr.rel (%p771) target = $region56
      $region55: #{tpu_custom_call.1} parent=5 // pred_region
        %s774 = ssub.s32 %s19, 2
        // Predicated region
        $region57: #{tpu_custom_call.1} parent=55 // pred_check
          %p775 = pneg %p142
        $region58: #{tpu_custom_call.1} parent=55 // pred_check_branch
          %777 = sbr.rel (%p775) target = $region60
        $region59: #{tpu_custom_call.1} parent=55 // pred_region
          %s778 = sand.u32 %s127, 1
          %s779 = scalar_lea.sflag [#allocation4], %s778
          %s780 = sand.u32 %s127, 1
          %s781 = smul.addr %s780, 128
          %s782 = scalar_lea.vmem [#allocation8], %s781
          %784 = dma.done %s779, 2048
        $region60: #{tpu_custom_call.1} parent=55 // pred_fallthru
          _
      $region56: #{tpu_custom_call.1} parent=5 // pred_fallthru
        _
    $region6: #{tpu_custom_call.1} parent=1 // loop_footer
      %s23 = sadd.s32 1, %s19
    $region7: #{tpu_custom_call.1} parent=1 // loop_footer_branch
      %18 = sbr.rel target = $region3
    $region8: #{tpu_custom_call.1} parent=1 // loop_exit
      _
    %785 = vsyncpa [#allocation3], 1
    %s786 = scalar_lea.sflag [#allocation3], 1
    %787 = vsyncpa %s786, 1
    %788 = vsyncpa [#allocation6], 1
    %s789 = scalar_lea.sflag [#allocation6], 1
    %790 = vsyncpa %s789, 1
    %791 = vsyncpa [#allocation4], 1
    %s792 = scalar_lea.sflag [#allocation4], 1
    %793 = vsyncpa %s792, 1

</llo_original>
